<compile_context>
chip_gen: v5e
topology: v5e:2x2
jax: 0.10.0
libtpu: 0.0.40
codegen_flags: <defaults>
</compile_context>

<pallas_src>
import functools

import jax
import jax.numpy as jnp
from jax.experimental import pallas as pl
from jax.experimental.pallas import tpu as pltpu


def _rmsnorm_kernel(x_ref, o_ref, *, eps):
    # x_ref / o_ref: (block_rows, H) tile in VMEM.
    xf = x_ref[...].astype(jnp.float32)                  # upcast once (VPU)
    var = jnp.mean(xf * xf, axis=-1, keepdims=True)      # lane reduce (XLU), f32
    inv = jax.lax.rsqrt(var + eps)                       # EUP
    # LlmcRMSNorm.forward: all math in f32, then cast back to the input dtype.
    o_ref[...] = (xf * inv).astype(o_ref.dtype)


def _round_up(x, m):
    return ((x + m - 1) // m) * m


def _sublane_multiple(dtype):
    itemsize = jnp.dtype(dtype).itemsize
    if itemsize >= 4:
        return 8
    if itemsize == 2:
        return 16
    return 32


def _vmem_capacity_bytes():
    try:
        cap = int(pltpu.get_tpu_info().vmem_capacity_bytes)
        if cap > 0:
            return cap
    except Exception:
        pass
    # Conservative fallback (v7x-sized VMEM) if the query is unavailable.
    return 64 * 1024 * 1024


def _choose_block_rows(n_rows, H, dtype, vmem_cap):
    """Largest dtype-aligned row block that fits the per-generation VMEM budget."""
    sublane = _sublane_multiple(dtype)
    itemsize = jnp.dtype(dtype).itemsize
    # ~1/3 of physical VMEM for the pipelined tiles: leaves headroom for Mosaic
    # scratch / semaphores.  ~21 MiB on v7x (64 MiB), ~42 MiB on v5e/v6e (128 MiB).
    tile_budget = max(vmem_cap // 3, 4 * 1024 * 1024)
    # Per-row pipelined footprint:
    #   input tile  (double-buffered): 2 * H * itemsize
    #   output tile (double-buffered): 2 * H * itemsize
    #   f32 working copy in-kernel   : 4 * H
    bytes_per_row = H * (4 * itemsize + 4)
    block_rows = tile_budget // max(bytes_per_row, 1)
    # Past ~512-1024 rows the DMA engine is saturated; bigger tiles just burn VMEM.
    block_rows = min(block_rows, 1024)
    block_rows = max(block_rows // sublane, 1) * sublane
    # No point tiling wider than the data itself (rounded to the sublane multiple).
    block_rows = min(block_rows, _round_up(n_rows, sublane))
    return block_rows


def llmc_rmsnorm(hidden_states, weight=None, eps=1e-6, block_rows=None):
    """Pallas TPU RMSNorm matching LlmcRMSNorm.forward.

    hidden_states: (..., H) array.
    weight: (H,) parameter (unused in forward, kept for parity with the module).
    """
    del weight  # LlmcRMSNorm.forward does not apply the weight.
    orig_shape = hidden_states.shape
    orig_dtype = hidden_states.dtype
    H = orig_shape[-1]
    x2d = hidden_states.reshape(-1, H)
    n_rows = x2d.shape[0]

    vmem_cap = _vmem_capacity_bytes()
    if block_rows is None:
        block_rows = _choose_block_rows(n_rows, H, orig_dtype, vmem_cap)

    itemsize = jnp.dtype(orig_dtype).itemsize
    # VMEM we actually need: double-buffered in + out tiles + f32 working copy,
    # plus headroom; raise the scoped limit so Mosaic admits the large tiles.
    vmem_needed = block_rows * H * (4 * itemsize + 4) + (8 << 20)
    vmem_limit = int(min(max(vmem_needed, 32 << 20), vmem_cap - (8 << 20)))

    # No padding: Pallas clips the final partial row block; the H-axis reduction
    # is unaffected and out-of-bounds rows are dropped on store.
    grid = (pl.cdiv(n_rows, block_rows),)

    out = pl.pallas_call(
        functools.partial(_rmsnorm_kernel, eps=float(eps)),
        out_shape=jax.ShapeDtypeStruct((n_rows, H), orig_dtype),
        grid_spec=pltpu.PrefetchScalarGridSpec(
            num_scalar_prefetch=0,
            grid=grid,
            in_specs=[pl.BlockSpec((block_rows, H), lambda i: (i, 0))],
            out_specs=pl.BlockSpec((block_rows, H), lambda i: (i, 0)),
        ),
        compiler_params=pltpu.CompilerParams(
            # Row blocks are independent -> megacore (v7x: 2 TCs) can shard the loop.
            dimension_semantics=("parallel",),
            vmem_limit_bytes=vmem_limit,
        ),
    )(x2d)

    return out.reshape(orig_shape)


if __name__ == "__main__":
    key = jax.random.PRNGKey(0)
    eps = 1e-6

    def _reference(x, eps):
        xf = x.astype(jnp.float32)
        var = jnp.mean(xf * xf, axis=-1, keepdims=True)
        return (xf * jax.lax.rsqrt(var + eps)).astype(x.dtype)

    k1, k2 = jax.random.split(key)

    # Case 1: small (batch, seq, hidden) f32 input, as implied by the module.
    x1 = jax.random.normal(k1, (2, 8, 32), dtype=jnp.float32)
    w1 = jnp.ones((32,), dtype=jnp.float32)  # unused in forward, kept for parity
    y1 = llmc_rmsnorm(x1, w1, eps)
    jax.block_until_ready(y1)
    assert jnp.allclose(y1, _reference(x1, eps), atol=1e-5, rtol=1e-5), "f32 mismatch"

    # Case 2: bf16 input with a row count (3*5=15) that does NOT divide the
    # block (exercises the clipped partial last block + bf16 sublane alignment).
    x2 = jax.random.normal(k2, (3, 5, 256), dtype=jnp.float32).astype(jnp.bfloat16)
    w2 = jnp.ones((256,), dtype=jnp.bfloat16)
    y2 = llmc_rmsnorm(x2, w2, eps)
    jax.block_until_ready(y2)
    ref2 = _reference(x2, eps)
    assert jnp.allclose(
        y2.astype(jnp.float32), ref2.astype(jnp.float32), atol=2e-2, rtol=2e-2
    ), "bf16 mismatch"

    print("KERNEL_OK")
</pallas_src>

<mosaic_0001>
module attributes {stable_mosaic.version = 11 : i64} {
  func.func @_rmsnorm_kernel(%arg0: i32, %arg1: memref<16x32xf32, #tpu.memory_space<vmem>>, %arg2: memref<16x32xf32, #tpu.memory_space<vmem>>) attributes {dimension_semantics = [#tpu.dimension_semantics<parallel>], iteration_bounds = array<i64: 1>, scalar_prefetch = 0 : i64, scratch_operands = 0 : i64, tpu.core_type = #tpu.core_type<tc>, window_params = [{transform_indices = @transform_0, window_bounds = array<i64: 16, 32>}, {transform_indices = @transform_1, window_bounds = array<i64: 16, 32>}]} {
    %c0 = arith.constant 0 : index
    %c0_0 = arith.constant 0 : index
    %0 = vector.load %arg1[%c0, %c0_0] : memref<16x32xf32, #tpu.memory_space<vmem>>, vector<16x32xf32>
    %1 = arith.mulf %0, %0 : vector<16x32xf32>
    %cst = arith.constant dense<0.000000e+00> : vector<16xf32>
    %2 = vector.multi_reduction <add>, %1, %cst [1] : vector<16x32xf32> to vector<16xf32>
    %3 = vector.shape_cast %2 : vector<16xf32> to vector<16x1xf32>
    %cst_1 = arith.constant 3.200000e+01 : f32
    %4 = vector.broadcast %cst_1 : f32 to vector<16x1xf32>
    %5 = arith.divf %3, %4 : vector<16x1xf32>
    %cst_2 = arith.constant 9.99999997E-7 : f32
    %6 = vector.broadcast %cst_2 : f32 to vector<16x1xf32>
    %7 = arith.addf %5, %6 : vector<16x1xf32>
    %8 = math.rsqrt %7 : vector<16x1xf32>
    %9 = vector.broadcast %8 : vector<16x1xf32> to vector<16x32xf32>
    %10 = arith.mulf %0, %9 : vector<16x32xf32>
    %c0_3 = arith.constant 0 : index
    %c0_4 = arith.constant 0 : index
    %11 = vector.load %arg2[%c0_3, %c0_4] : memref<16x32xf32, #tpu.memory_space<vmem>>, vector<16x32xf32>
    tpu.vector_store %arg2[%c0_3, %c0_4], %10 {strides = array<i32>} : memref<16x32xf32, #tpu.memory_space<vmem>>, vector<16x32xf32>,
    return
  }
  func.func @transform_0(%arg0: i32) -> (i32, i32) {
    %c0_i32 = arith.constant 0 : i32
    %c0_i32_0 = arith.constant 0 : i32
    return %arg0, %c0_i32 : i32, i32
  }
  func.func @transform_1(%arg0: i32) -> (i32, i32) {
    %c0_i32 = arith.constant 0 : i32
    %c0_i32_0 = arith.constant 0 : i32
    return %arg0, %c0_i32 : i32, i32
  }
}

</mosaic_0001>

<llo_original>
// kernel: tpu_custom_call.1
$region0: #{tpu_custom_call.1}
  #allocation0 [shape = 'u32[]', space=smem, size = 0x4, offset = 0x4, fixed_abs, tag = 'smem constant byte address 0x4 - core index']
  #allocation1 [shape = 'u32[72,128]{1,0:T(1,128)}', space=vmem, size = 0x9000, scoped, tag = 'internal scratch']
  %s0 = inlined_call_operand.hbm [shape: f32[16,32], index: 0, kind: input, shape index: {}]
  %s1 = inlined_call_operand.hbm [shape: f32[16,32], index: 1, kind: output, shape index: {}]
  %s2 = sld [smem:[#allocation0]]
  $region18: #{tpu_custom_call.1} parent=0
    _
  %s4 = ssub.s32 1, %s2
  %s5 = scalar_select 0, %s4, %s2
  $region1: #{tpu_custom_call.1} parent=0
    #allocation2 [shape = 'u8[8192]{0}', space=vmem, size = 0x2000, scoped, tag = 'input window, operand 0, single buffered']
    #allocation3 [shape = 's32[1]{0}', space=sflag, size = 0x4, scoped, tag = 'scoped memory for tpu_custom_call.1']
    #allocation4 [shape = 's32[1]{0}', space=sflag, size = 0x4, scoped, tag = 'scoped memory for tpu_custom_call.1']
    #allocation5 [shape = 'u8[8192]{0}', space=vmem, size = 0x2000, scoped, tag = 'output window, operand 0, single buffered']
    %6 = vsyncpa [#allocation3], 0
    %7 = vsyncpa [#allocation4], 0
    // Predicated region
    $region2: #{tpu_custom_call.1} parent=1 // pred_check
      _
    $region3: #{tpu_custom_call.1} parent=1 // pred_check_branch
      %9 = sbr.rel (0) target = $region5
    $region4: #{tpu_custom_call.1} parent=1 // pred_region
      %11 = vsyncadd [#allocation3], 0
      %s12 = sshll.u32 %s0, 4
      %s13 = int_to_ptr.hbm [resolvable:$true] %s12
      %s14 = sshll.u32 [#allocation2], 4
      %s15 = int_to_ptr.vmem [resolvable:$true] %s14
      %20 = dma.hbm_to_vmem [thread:$0]  %s13, 256, %s15, [#allocation3], 128, 128, 8
    $region5: #{tpu_custom_call.1} parent=1 // pred_fallthru
      _
    // Predicated region
    $region6: #{tpu_custom_call.1} parent=1 // pred_check
      _
    $region7: #{tpu_custom_call.1} parent=1 // pred_check_branch
      %22 = sbr.rel (0) target = $region9
    $region8: #{tpu_custom_call.1} parent=1 // pred_region
      %24 = dma.done [#allocation3], 256
    $region9: #{tpu_custom_call.1} parent=1 // pred_fallthru
      _
    %v25 = vld [vmem:[#allocation2] sm:$0xff]
    %v26 = vld [vmem:[#allocation2 + $0x8] sm:$0xff]
    %v27 = vmul.f32 %v25, %v25
    %v28 = vmul.f32 %v26, %v26
    %vm29 = vcmask 261120
    %v30 = vsel %vm29, %v27, 0.0
    %31 = vadd.xlane.f32.xlu0 %v30
    %v32 = vpop.xlane.xlu0 %31
    %v33 = vsel %vm29, %v28, 0.0
    %34 = vadd.xlane.f32.xlu0 %v33
    %v35 = vpop.xlane.xlu0 %34
    %v36 = vrcp.pop 32.0
    %v37 = vmul.f32 32.0, %v36
    %v38 = vsub.f32 1.0, %v37
    %v39 = vmul.f32 %v36, %v38
    %v40 = vadd.f32 %v36, %v39
    %vm41 = vweird.f32 %v36
    %v42 = vsel %vm41, %v36, %v40
    %v43 = vmul.f32 %v32, %v42
    %v44 = vmul.f32 %v35, %v42
    %v45 = vadd.f32 %v43, 1e-06
    %v46 = vadd.f32 %v44, 1e-06
    %v47 = vrsqrt.pop %v45
    %v48 = vmul.f32 %v47, %v45
    %v49 = vmul.f32 %v48, %v47
    %v50 = vmul.f32 0.5, %v49
    %v51 = vsub.f32 1.5, %v50
    %v52 = vmul.f32 %v47, %v51
    %vm53 = vweird.f32 %v45
    %vm54 = vweird.f32 %v47
    %vm55 = vmor %vm53, %vm54
    %v56 = vsel %vm55, %v47, %v52
    %v57 = vrsqrt.pop %v46
    %v58 = vmul.f32 %v57, %v46
    %v59 = vmul.f32 %v58, %v57
    %v60 = vmul.f32 0.5, %v59
    %v61 = vsub.f32 1.5, %v60
    %v62 = vmul.f32 %v57, %v61
    %vm63 = vweird.f32 %v46
    %vm64 = vweird.f32 %v57
    %vm65 = vmor %vm63, %vm64
    %v66 = vsel %vm65, %v57, %v62
    %v67 = vmul.f32 %v25, %v56
    %v68 = vmul.f32 %v26, %v66
    %69 = vst.msk [vmem:[#allocation5] sm:$0xff] %vm29, %v67
    %70 = vst.msk [vmem:[#allocation5 + $0x8] sm:$0xff] %vm29, %v68
    // Predicated region
    $region10: #{tpu_custom_call.1} parent=1 // pred_check
      _
    $region11: #{tpu_custom_call.1} parent=1 // pred_check_branch
      %72 = sbr.rel (0) target = $region13
    $region12: #{tpu_custom_call.1} parent=1 // pred_region
      %74 = vsyncadd [#allocation4], 0
      %s75 = sshll.u32 [#allocation5], 4
      %s76 = int_to_ptr.vmem [resolvable:$true] %s75
      %s77 = sshll.u32 %s1, 4
      %s78 = int_to_ptr.hbm [resolvable:$true] %s77
      %83 = dma.vmem_to_hbm [thread:$0]  %s76, 256, %s78, [#allocation4], 128, 128, 8
    $region13: #{tpu_custom_call.1} parent=1 // pred_fallthru
      _
    // Predicated region
    $region14: #{tpu_custom_call.1} parent=1 // pred_check
      _
    $region15: #{tpu_custom_call.1} parent=1 // pred_check_branch
      %85 = sbr.rel (0) target = $region17
    $region16: #{tpu_custom_call.1} parent=1 // pred_region
      %87 = dma.done [#allocation4], 256
    $region17: #{tpu_custom_call.1} parent=1 // pred_fallthru
      _
    %88 = vsyncpa [#allocation3], 1
    %89 = vsyncpa [#allocation4], 1

</llo_original>
